<compile_context>
chip_gen: v7x
topology: tpu7x:2x2x1
jax: 0.10.0
libtpu: 0.0.40
codegen_flags: <defaults>
</compile_context>

<pallas_src>
import functools

import jax
import jax.numpy as jnp
from jax.experimental import pallas as pl
from jax.experimental.pallas import tpu as pltpu


def _round_up(x: int, m: int) -> int:
    return ((x + m - 1) // m) * m


def _vmem_budget_bytes() -> int:
    """~75% of physical VMEM: 96 MiB on v5e/v6e (128 MiB), 48 MiB on v7x (64 MiB)."""
    try:
        cap = int(pltpu.get_tpu_info().vmem_capacity_bytes)
    except Exception:  # pragma: no cover - conservative fallback
        cap = 64 * 1024 * 1024
    return min(100 * 1024 * 1024, (3 * cap) // 4)


def _choose_tiles(B, D, C, tm, tn, tk, in_itemsize, out_itemsize, vmem_budget):
    # Clamp to (aligned) problem size: tm multiple of 8, tk/tn multiples of 128.
    tm = min(tm, _round_up(B, 8))
    tk = min(tk, _round_up(D, 128))
    tn = min(tn, _round_up(C, 128))

    # v7x megacore: if the whole batch fits in a single M-tile, split the
    # class axis into >=2 N-tiles so both TensorCores get work.
    if (_round_up(B, 8) <= tm
            and _round_up(C, 128) <= tn
            and _round_up(C, 128) >= 256):
        tn = _round_up(_round_up(C, 128) // 2, 128)

    def vmem_use(tm_, tn_, tk_):
        return (2 * tm_ * tk_ * in_itemsize      # x tile, double-buffered
                + 2 * tk_ * tn_ * in_itemsize    # w_t tile, double-buffered
                + 2 * tn_ * 4                    # bias row (f32)
                + 2 * tm_ * tn_ * out_itemsize   # output tile, double-buffered
                + tm_ * tn_ * 4)                 # f32 accumulator

    # Shrink until tiles fit in ~80% of the per-generation VMEM budget.
    while vmem_use(tm, tn, tk) > (4 * vmem_budget) // 5:
        if tk >= 512:
            tk //= 2                             # stays a multiple of 128
        elif tm >= 512:
            tm = max(8, _round_up(tm // 2, 8))
        elif tn >= 256:
            tn //= 2                             # stays a multiple of 128
        else:
            break
    return tm, tn, tk


def _linear_kernel(x_ref, w_ref, b_ref, o_ref, acc_ref):
    k = pl.program_id(2)

    @pl.when(k == 0)
    def _():
        # Fold the bias into the accumulator init (exactly once per (i, j) tile).
        acc_ref[...] = jnp.broadcast_to(
            b_ref[...].astype(jnp.float32), acc_ref.shape
        )

    acc_ref[...] += jnp.dot(
        x_ref[...], w_ref[...], preferred_element_type=jnp.float32
    )

    @pl.when(k == pl.num_programs(2) - 1)
    def _():
        o_ref[...] = acc_ref[...].astype(o_ref.dtype)


@functools.partial(jax.jit, static_argnames=("tm", "tn", "tk", "compute_dtype"))
def one_layer_mlp(x, w_t, b, *, tm=1024, tn=512, tk=2048,
                  compute_dtype=jnp.bfloat16):
    """y = x @ w_t + b, with w_t of shape (input_dim, num_classes)."""
    B, D = x.shape
    Dw, C = w_t.shape
    assert D == Dw and b.shape == (C,)

    out_dtype = x.dtype
    if compute_dtype is not None:
        x = x.astype(compute_dtype)
        w_t = w_t.astype(compute_dtype)

    in_itemsize = jnp.dtype(x.dtype).itemsize
    out_itemsize = jnp.dtype(out_dtype).itemsize
    vmem_budget = _vmem_budget_bytes()

    tm, tn, tk = _choose_tiles(
        B, D, C, tm, tn, tk, in_itemsize, out_itemsize, vmem_budget
    )

    Bp, Dp, Cp = _round_up(B, tm), _round_up(D, tk), _round_up(C, tn)

    xp = x if (Bp, Dp) == (B, D) else jnp.pad(x, ((0, Bp - B), (0, Dp - D)))
    wp = w_t if (Dp, Cp) == (D, C) else jnp.pad(w_t, ((0, Dp - D), (0, Cp - C)))
    bp = (b if Cp == C else jnp.pad(b, (0, Cp - C))).reshape(1, Cp)
    bp = bp.astype(jnp.float32)   # bias stays f32, added once at k==0

    grid = (Bp // tm, Cp // tn, Dp // tk)
    n_m, n_n, _ = grid

    cost = pl.CostEstimate(
        flops=2 * Bp * Dp * Cp,
        transcendentals=0,
        bytes_accessed=(Bp * Dp * n_n + Dp * Cp * n_m) * in_itemsize
        + Cp * 4
        + Bp * Cp * out_itemsize,
    )

    yp = pl.pallas_call(
        _linear_kernel,
        out_shape=jax.ShapeDtypeStruct((Bp, Cp), out_dtype),
        grid=grid,
        in_specs=[
            pl.BlockSpec((tm, tk), lambda i, j, k: (i, k)),   # x tile
            pl.BlockSpec((tk, tn), lambda i, j, k: (k, j)),   # w_t tile
            pl.BlockSpec((1, tn), lambda i, j, k: (0, j)),    # bias row
        ],
        out_specs=pl.BlockSpec((tm, tn), lambda i, j, k: (i, j)),
        scratch_shapes=[pltpu.VMEM((tm, tn), jnp.float32)],
        compiler_params=pltpu.CompilerParams(
            dimension_semantics=("parallel", "parallel", "arbitrary"),
            vmem_limit_bytes=vmem_budget,
        ),
        cost_estimate=cost,
    )(xp, wp, bp)

    return yp[:B, :C]


if __name__ == "__main__":
    key = jax.random.PRNGKey(0)

    # ---- Small demo shapes implied by the module: x (batch, input_dim) ----
    batch, input_dim, num_classes = 8, 32, 16
    kx, kw, kb, k2 = jax.random.split(key, 4)

    x = jax.random.normal(kx, (batch, input_dim), dtype=jnp.float32)
    bound = 1.0 / (input_dim ** 0.5)
    w = jax.random.uniform(kw, (num_classes, input_dim), dtype=jnp.float32,
                           minval=-bound, maxval=bound)  # torch layout (out, in)
    b = jax.random.uniform(kb, (num_classes,), dtype=jnp.float32,
                           minval=-bound, maxval=bound)

    # f32 MXU feed: matches the torch reference bit-tight.
    y = one_layer_mlp(x, w.T, b, compute_dtype=jnp.float32)
    jax.block_until_ready(y)
    y_ref = x @ w.T + b
    assert y.shape == (batch, num_classes)
    assert jnp.allclose(y, y_ref, atol=1e-5, rtol=1e-5)

    # ---- Larger shape: multi-tile grid, K accumulation, padding, bf16 feed ----
    B2, D2, C2 = 256, 1024, 300
    kx2, kw2, kb2 = jax.random.split(k2, 3)
    x2 = jax.random.normal(kx2, (B2, D2), dtype=jnp.float32)
    w2 = jax.random.normal(kw2, (C2, D2), dtype=jnp.float32) * (1.0 / D2 ** 0.5)
    b2 = jax.random.normal(kb2, (C2,), dtype=jnp.float32)

    # Default compute_dtype=bf16 (f32 accumulation) — compare within bf16 tolerance.
    y2 = one_layer_mlp(x2, w2.T, b2)
    jax.block_until_ready(y2)
    y2_ref = x2 @ w2.T + b2
    assert y2.shape == (B2, C2)
    assert jnp.allclose(y2, y2_ref, atol=5e-2, rtol=5e-2)

    # Also verify exact-path f32 compute on the large shape.
    y2f = one_layer_mlp(x2, w2.T, b2, compute_dtype=jnp.float32)
    jax.block_until_ready(y2f)
    assert jnp.allclose(y2f, y2_ref, atol=1e-3, rtol=1e-5)

    print("KERNEL_OK")
</pallas_src>

<mosaic_0001>
module attributes {stable_mosaic.version = 11 : i64} {
  func.func @_linear_kernel(%arg0: i32, %arg1: i32, %arg2: i32, %arg3: memref<8x128xf32, #tpu.memory_space<vmem>>, %arg4: memref<128x128xf32, #tpu.memory_space<vmem>>, %arg5: memref<1x128xf32, #tpu.memory_space<vmem>>, %arg6: memref<8x128xf32, #tpu.memory_space<vmem>>, %arg7: memref<8x128xf32, #tpu.memory_space<vmem>>) attributes {dimension_semantics = [#tpu.dimension_semantics<parallel>, #tpu.dimension_semantics<parallel>, #tpu.dimension_semantics<arbitrary>], iteration_bounds = array<i64: 1, 1, 1>, scalar_prefetch = 0 : i64, scratch_operands = 1 : i64, tpu.core_type = #tpu.core_type<tc>, window_params = [{transform_indices = @transform_0, window_bounds = array<i64: 8, 128>}, {transform_indices = @transform_1, window_bounds = array<i64: 128, 128>}, {transform_indices = @transform_2, window_bounds = array<i64: 1, 128>}, {transform_indices = @transform_3, window_bounds = array<i64: 8, 128>}]} {
    %c0_i32 = arith.constant 0 : i32
    %0 = arith.cmpi eq, %arg2, %c0_i32 : i32
    %1 = arith.extui %0 : i1 to i32
    %c0_i32_0 = arith.constant 0 : i32
    %2 = arith.cmpi ne, %1, %c0_i32_0 : i32
    scf.if %2 {
      %c0_10 = arith.constant 0 : index
      %c0_11 = arith.constant 0 : index
      %12 = vector.load %arg5[%c0_10, %c0_11] : memref<1x128xf32, #tpu.memory_space<vmem>>, vector<1x128xf32>
      %13 = vector.shape_cast %12 : vector<1x128xf32> to vector<1x128xf32>
      %14 = vector.broadcast %13 : vector<1x128xf32> to vector<8x128xf32>
      %c0_12 = arith.constant 0 : index
      %c0_13 = arith.constant 0 : index
      %15 = vector.load %arg7[%c0_12, %c0_13] : memref<8x128xf32, #tpu.memory_space<vmem>>, vector<8x128xf32>
      tpu.vector_store %arg7[%c0_12, %c0_13], %14 {strides = array<i32>} : memref<8x128xf32, #tpu.memory_space<vmem>>, vector<8x128xf32>,
    } else {
    }
    %c0 = arith.constant 0 : index
    %c0_1 = arith.constant 0 : index
    %3 = vector.load %arg7[%c0, %c0_1] : memref<8x128xf32, #tpu.memory_space<vmem>>, vector<8x128xf32>
    %c0_2 = arith.constant 0 : index
    %c0_3 = arith.constant 0 : index
    %4 = vector.load %arg3[%c0_2, %c0_3] : memref<8x128xf32, #tpu.memory_space<vmem>>, vector<8x128xf32>
    %c0_4 = arith.constant 0 : index
    %c0_5 = arith.constant 0 : index
    %5 = vector.load %arg4[%c0_4, %c0_5] : memref<128x128xf32, #tpu.memory_space<vmem>>, vector<128x128xf32>
    %cst = arith.constant dense<0.000000e+00> : vector<8x128xf32>
    %6 = tpu.matmul %4, %5, %cst {dimension_numbers = #tpu.dot_dimension_numbers<[1], [0], [0], [1], [0, 0, 1, 1], [], []>} : vector<8x128xf32>, vector<128x128xf32>, vector<8x128xf32> -> vector<8x128xf32>
    %7 = arith.addf %3, %6 : vector<8x128xf32>
    %c0_6 = arith.constant 0 : index
    %c0_7 = arith.constant 0 : index
    %8 = vector.load %arg7[%c0_6, %c0_7] : memref<8x128xf32, #tpu.memory_space<vmem>>, vector<8x128xf32>
    tpu.vector_store %arg7[%c0_6, %c0_7], %7 {strides = array<i32>} : memref<8x128xf32, #tpu.memory_space<vmem>>, vector<8x128xf32>,
    %c0_i32_8 = arith.constant 0 : i32
    %9 = arith.cmpi eq, %arg2, %c0_i32_8 : i32
    %10 = arith.extui %9 : i1 to i32
    %c0_i32_9 = arith.constant 0 : i32
    %11 = arith.cmpi ne, %10, %c0_i32_9 : i32
    scf.if %11 {
      %c0_10 = arith.constant 0 : index
      %c0_11 = arith.constant 0 : index
      %12 = vector.load %arg7[%c0_10, %c0_11] : memref<8x128xf32, #tpu.memory_space<vmem>>, vector<8x128xf32>
      %c0_12 = arith.constant 0 : index
      %c0_13 = arith.constant 0 : index
      %13 = vector.load %arg6[%c0_12, %c0_13] : memref<8x128xf32, #tpu.memory_space<vmem>>, vector<8x128xf32>
      tpu.vector_store %arg6[%c0_12, %c0_13], %12 {strides = array<i32>} : memref<8x128xf32, #tpu.memory_space<vmem>>, vector<8x128xf32>,
    } else {
    }
    return
  }
  func.func @transform_0(%arg0: i32, %arg1: i32, %arg2: i32) -> (i32, i32) {
    %c0_i32 = arith.constant 0 : i32
    return %arg0, %arg2 : i32, i32
  }
  func.func @transform_1(%arg0: i32, %arg1: i32, %arg2: i32) -> (i32, i32) {
    %c0_i32 = arith.constant 0 : i32
    return %arg2, %arg1 : i32, i32
  }
  func.func @transform_2(%arg0: i32, %arg1: i32, %arg2: i32) -> (i32, i32) {
    %c0_i32 = arith.constant 0 : i32
    %c0_i32_0 = arith.constant 0 : i32
    return %c0_i32, %arg1 : i32, i32
  }
  func.func @transform_3(%arg0: i32, %arg1: i32, %arg2: i32) -> (i32, i32) {
    %c0_i32 = arith.constant 0 : i32
    return %arg0, %arg1 : i32, i32
  }
}

</mosaic_0001>

<llo_original>
// kernel: one_layer_mlp.1
$region0: #{one_layer_mlp.1}
  #allocation0 [shape = 'u32[]', space=smem, size = 0x4, offset = 0x4, fixed_abs, tag = 'smem constant byte address 0x4 - core index']
  #allocation1 [shape = 'u32[144,128]{1,0:T(1,128)}', space=vmem, size = 0x12000, scoped, tag = 'internal scratch']
  #allocation2 [shape = 'f32[8,128]{1,0:T(8,128)}', space=vmem, size = 0x1000, scoped, tag = 'scratch operand']
  %s0 = inlined_call_operand.vmem [shape: f32[8,128], index: 0, kind: input, shape index: {}]
  %s1 = inlined_call_operand.vmem [shape: f32[128,128], index: 1, kind: input, shape index: {}]
  %s2 = inlined_call_operand.vmem [shape: f32[1,128], index: 2, kind: input, shape index: {}]
  %s3 = inlined_call_operand.hbm [shape: f32[8,128], index: 3, kind: output, shape index: {}]
  %s4 = sld [smem:[#allocation0]]
  $region30: #{one_layer_mlp.1} parent=0
    _
  %s6 = ssub.s32 1, %s4
  %s7 = scalar_select 0, %s6, %s4
  $region1: #{one_layer_mlp.1} parent=0
    #allocation3 [shape = 'u8[4096]{0}', space=vmem, size = 0x1000, scoped, tag = 'output window, operand 0, single buffered']
    #allocation4 [shape = 's32[1]{0}', space=sflag, size = 0x4, scoped, tag = 'scoped memory for one_layer_mlp.1']
    %8 = vsyncpa [#allocation4], 0
    // Predicated region
    $region2: #{one_layer_mlp.1} parent=1 // pred_check
      _
    $region3: #{one_layer_mlp.1} parent=1 // pred_check_branch
      %10 = sbr.rel (0) target = $region5
    $region4: #{one_layer_mlp.1} parent=1 // pred_region
      _
    $region5: #{one_layer_mlp.1} parent=1 // pred_fallthru
      _
    // Predicated region
    $region6: #{one_layer_mlp.1} parent=1 // pred_check
      _
    $region7: #{one_layer_mlp.1} parent=1 // pred_check_branch
      %12 = sbr.rel (0) target = $region9
    $region8: #{one_layer_mlp.1} parent=1 // pred_region
      _
    $region9: #{one_layer_mlp.1} parent=1 // pred_fallthru
      _
    // Predicated region
    $region10: #{one_layer_mlp.1} parent=1 // pred_check
      _
    $region11: #{one_layer_mlp.1} parent=1 // pred_check_branch
      %14 = sbr.rel (0) target = $region13
    $region12: #{one_layer_mlp.1} parent=1 // pred_region
      _
    $region13: #{one_layer_mlp.1} parent=1 // pred_fallthru
      _
    %p15 = scmp.eq.s32.totalorder 0, 0
    // Predicated region
    $region14: #{one_layer_mlp.1} parent=1 // pred_check
      %p16 = pneg %p15
    $region15: #{one_layer_mlp.1} parent=1 // pred_check_branch
      %18 = sbr.rel (%p16) target = $region17
    $region16: #{one_layer_mlp.1} parent=1 // pred_region
      %v19 = vld [vmem:[%s2] sm:$0x1]
      %v21 = vlaneseq
      %v22 = vshrl.u32 %v21, 7
      %v23 = vsub.s32 0, %v22
      %v24 = vrot.slane %v19, %v23
      %26 = vst [vmem:[#allocation2] sm:$0xff] %v24
    $region17: #{one_layer_mlp.1} parent=1 // pred_fallthru
      _
    %v27 = vld [vmem:[#allocation2] sm:$0xff]
    %v28 = vld [vmem:[%s0] sm:$0xff]
    %v29 = vld [vmem:[%s1] sm:$0xff]
    %v30 = vld [vmem:[%s1 + $0x8] sm:$0xff]
    %v31 = vld [vmem:[%s1 + $0x10] sm:$0xff]
    %v32 = vld [vmem:[%s1 + $0x18] sm:$0xff]
    %v33 = vld [vmem:[%s1 + $0x20] sm:$0xff]
    %v34 = vld [vmem:[%s1 + $0x28] sm:$0xff]
    %v35 = vld [vmem:[%s1 + $0x30] sm:$0xff]
    %v36 = vld [vmem:[%s1 + $0x38] sm:$0xff]
    %v37 = vld [vmem:[%s1 + $0x40] sm:$0xff]
    %v38 = vld [vmem:[%s1 + $0x48] sm:$0xff]
    %v39 = vld [vmem:[%s1 + $0x50] sm:$0xff]
    %v40 = vld [vmem:[%s1 + $0x58] sm:$0xff]
    %v41 = vld [vmem:[%s1 + $0x60] sm:$0xff]
    %v42 = vld [vmem:[%s1 + $0x68] sm:$0xff]
    %v43 = vld [vmem:[%s1 + $0x70] sm:$0xff]
    %v44 = vld [vmem:[%s1 + $0x78] sm:$0xff]
    %45 = vmatprep.subr.mxu0 0.0
    %46 = vmatpush1.msra.mxu0 %v29
    %47 = vmatprep.subr.mxu0 0.0
    %48 = vmatpush1.msra.mxu0 %v30
    %49 = vmatprep.subr.mxu0 0.0
    %50 = vmatpush1.msra.mxu0 %v31
    %51 = vmatprep.subr.mxu0 0.0
    %52 = vmatpush1.msra.mxu0 %v32
    %53 = vmatprep.subr.mxu0 0.0
    %54 = vmatpush1.msra.mxu0 %v33
    %55 = vmatprep.subr.mxu0 0.0
    %56 = vmatpush1.msra.mxu0 %v34
    %57 = vmatprep.subr.mxu0 0.0
    %58 = vmatpush1.msra.mxu0 %v35
    %59 = vmatprep.subr.mxu0 0.0
    %60 = vmatpush1.msra.mxu0 %v36
    %61 = vmatprep.subr.mxu0 0.0
    %62 = vmatpush1.msra.mxu0 %v37
    %63 = vmatprep.subr.mxu0 0.0
    %64 = vmatpush1.msra.mxu0 %v38
    %65 = vmatprep.subr.mxu0 0.0
    %66 = vmatpush1.msra.mxu0 %v39
    %67 = vmatprep.subr.mxu0 0.0
    %68 = vmatpush1.msra.mxu0 %v40
    %69 = vmatprep.subr.mxu0 0.0
    %70 = vmatpush1.msra.mxu0 %v41
    %71 = vmatprep.subr.mxu0 0.0
    %72 = vmatpush1.msra.mxu0 %v42
    %73 = vmatprep.subr.mxu0 0.0
    %74 = vmatpush1.msra.mxu0 %v43
    %75 = vmatprep.subr.mxu0 0.0
    %76 = vmatpush1.msra.mxu0 %v44
    %77 = vmatprep.subr.mxu0 0.0
    %78 = vmatpush1.msra.mxu0 0.0
    %79 = vmatprep.subr.mxu0 0.0
    %80 = vmatpush1.msra.mxu0 0.0
    %81 = vmatprep.subr.mxu0 0.0
    %82 = vmatpush1.msra.mxu0 0.0
    %83 = vmatprep.subr.mxu0 0.0
    %84 = vmatpush1.msra.mxu0 0.0
    %85 = vmatprep.subr.mxu0 0.0
    %86 = vmatpush1.msra.mxu0 0.0
    %87 = vmatprep.subr.mxu0 0.0
    %88 = vmatpush1.msra.mxu0 0.0
    %89 = vmatprep.subr.mxu0 0.0
    %90 = vmatpush1.msra.mxu0 0.0
    %91 = vmatprep.subr.mxu0 0.0
    %92 = vmatpush1.msra.mxu0 0.0
    %93 = vmatprep.subr.mxu0 0.0
    %94 = vmatpush1.msra.mxu0 0.0
    %95 = vmatprep.subr.mxu0 0.0
    %96 = vmatpush1.msra.mxu0 0.0
    %97 = vmatprep.subr.mxu0 0.0
    %98 = vmatpush1.msra.mxu0 0.0
    %99 = vmatprep.subr.mxu0 0.0
    %100 = vmatpush1.msra.mxu0 0.0
    %101 = vmatprep.subr.mxu0 0.0
    %102 = vmatpush1.msra.mxu0 0.0
    %103 = vmatprep.subr.mxu0 0.0
    %104 = vmatpush1.msra.mxu0 0.0
    %105 = vmatprep.subr.mxu0 0.0
    %106 = vmatpush1.msra.mxu0 0.0
    %107 = vmatprep.subr.mxu0 0.0
    %108 = vmatpush1.msra.mxu0 0.0
    %109 = vmatprep.mubr.f32.mxu0 0.0
    %110 = vmatmul.mubr.f32.gmra.mrb[0].mxu0 %v28
    %v111 = vpop.f32.mrb[0].mxu0
    %v112 = vadd.f32 0.0, %v111
    %v113 = vpop.f32.mrb[0].mxu0
    %114 = vdwg.mxu0
    %v115 = vadd.f32 %v27, %v112
    %116 = vst [vmem:[#allocation2] sm:$0xff] %v115
    // Predicated region
    $region18: #{one_layer_mlp.1} parent=1 // pred_check
      %p117 = pneg %p15
    $region19: #{one_layer_mlp.1} parent=1 // pred_check_branch
      %119 = sbr.rel (%p117) target = $region21
    $region20: #{one_layer_mlp.1} parent=1 // pred_region
      %v120 = vld [vmem:[#allocation2] sm:$0xff]
      %121 = vst [vmem:[#allocation3] sm:$0xff] %v120
    $region21: #{one_layer_mlp.1} parent=1 // pred_fallthru
      _
    // Predicated region
    $region22: #{one_layer_mlp.1} parent=1 // pred_check
      _
    $region23: #{one_layer_mlp.1} parent=1 // pred_check_branch
      %123 = sbr.rel (0) target = $region25
    $region24: #{one_layer_mlp.1} parent=1 // pred_region
      %s125 = ssub.s32 128, 128
      %126 = vsyncadd [#allocation4], %s125
      %s128 = sshll.u32 [#allocation3], 4
      %s129 = int_to_ptr.vmem [resolvable:$true] %s128
      %131 = dma.vmem_to_hbm [thread:$0]  %s129, 128, %s3, [#allocation4]
    $region25: #{one_layer_mlp.1} parent=1 // pred_fallthru
      _
    // Predicated region
    $region26: #{one_layer_mlp.1} parent=1 // pred_check
      _
    $region27: #{one_layer_mlp.1} parent=1 // pred_check_branch
      %133 = sbr.rel (0) target = $region29
    $region28: #{one_layer_mlp.1} parent=1 // pred_region
      %134 = dma.done [#allocation4], 128
    $region29: #{one_layer_mlp.1} parent=1 // pred_fallthru
      _
    %135 = vsyncpa [#allocation4], 1

</llo_original>
